<compile_context>
chip_gen: v7x
topology: tpu7x:2x2x1
jax: 0.10.0
libtpu: 0.0.40
codegen_flags: <defaults>
</compile_context>

<pallas_src>
import functools

import jax
import jax.numpy as jnp
from jax import lax
from jax.experimental import pallas as pl
from jax.experimental.pallas import tpu as pltpu


def _round_up(x: int, m: int) -> int:
    return (x + m - 1) // m * m


def _rigid_kernel(w_ref, xyz_ref, t_ref, o_ref):
    """One tile of the LBS rigid warp, channel-major / lane-dense.

    w_ref:   (tile_n, J)  skinning weights (f32 or bf16)
    xyz_ref: (3, tile_n)  gaussian means, channel-major, f32
    t_ref:   (16, J)      flattened bone transforms, t[4r+c, j] = T[j, r, c]
                          (rows 12..15 are zero padding), same dtype as w_ref
    o_ref:   (3, tile_n)  deformed means, channel-major, f32
    """
    # Blend the bone transforms on the MXU with N on the lane axis:
    #   A[k, n] = sum_j t[k, j] * w[n, j]          -> (16, tile_n), f32 acc.
    A = lax.dot_general(
        t_ref[...],
        w_ref[...],
        dimension_numbers=(((1,), (1,)), ((), ())),
        preferred_element_type=jnp.float32,
    )

    x = xyz_ref[0, :].astype(jnp.float32)
    y = xyz_ref[1, :].astype(jnp.float32)
    z = xyz_ref[2, :].astype(jnp.float32)

    # Apply the per-point (row-major) 3x4 transform.  Each A[4r+c, :] is a
    # sublane slice; each product is a full-width lane-dense VPU FMA.  The
    # homogeneous "+1" is folded into the translation term A[4r+3, :].
    # Store each row as it is computed (no stack / relayout, earlier stores).
    for r in range(3):
        o_ref[r, :] = (
            A[4 * r + 0, :] * x
            + A[4 * r + 1, :] * y
            + A[4 * r + 2, :] * z
            + A[4 * r + 3, :]
        ).astype(o_ref.dtype)


@functools.partial(jax.jit, static_argnames=("tile_n", "channel_major"))
def rigid_deform(xyz, weights, transforms, *, tile_n=16384, channel_major=False):
    """Rigid (LBS) deformation of gaussian positions.

    xyz:        (N, 3) gaussian means, or (3, N) if channel_major=True
    weights:    (N, J) skinning weights (rows sum to 1); f32 or bf16
    transforms: (J, 4, 4) rigid bone transforms
    returns:    (N, 3) deformed means, or (3, N) if channel_major=True
    """
    if channel_major:
        N = xyz.shape[1]
        xyz_t = xyz.astype(jnp.float32)                                 # (3, N)
    else:
        N = xyz.shape[0]
        xyz_t = xyz.T.astype(jnp.float32)                               # (3, N)
    J = weights.shape[1]

    # Blend dtype follows the caller's weights dtype (bf16 halves the dominant
    # HBM stream; the matmul accumulates in f32 either way).
    blend_dtype = (
        weights.dtype if weights.dtype in (jnp.bfloat16, jnp.float32) else jnp.float32
    )
    weights = weights.astype(blend_dtype)

    # Only the first 3 rows of each 4x4 matter for positions; flatten to
    # (J, 12), transpose so J is the contracting dim, pad sublanes to 16.
    t12 = transforms[:, :3, :].reshape(J, 12).T.astype(blend_dtype)     # (12, J)
    t16 = jnp.zeros((16, J), blend_dtype).at[:12, :].set(t12)           # (16, J)

    # Tile selection: large tiles amortize the ~0.35 us/step pipeline overhead;
    # keep >= 4 grid steps when possible (2 per v7x TensorCore) so both cores
    # get pipelined work under dimension_semantics=("parallel",).
    n128 = _round_up(N, 128)
    tile = max(128, min(int(tile_n), 32768, n128))
    tile = _round_up(tile, 128)
    min_steps = 4
    if n128 >= min_steps * 128:
        tile = min(tile, _round_up(-(-n128 // min_steps), 128))

    # Ragged tail handled by Pallas boundary masking — no wrapper-side padding
    # (which would copy the whole weights array).
    grid = (pl.cdiv(N, tile),)

    # VMEM budget: weights tile lane-pads J -> 128, xyz/out sublane-pad 3 -> 8,
    # everything double-buffered.  Floor 16 MiB, cap 48 MiB (v7x has 64 MiB).
    w_bytes = jnp.finfo(blend_dtype).bits // 8
    per_step = tile * 128 * w_bytes + 2 * 8 * tile * 4 + 16 * 128 * w_bytes
    vmem_limit = min(max(2 * per_step + (1 << 20), 16 << 20), 48 << 20)

    out = pl.pallas_call(
        _rigid_kernel,
        out_shape=jax.ShapeDtypeStruct((3, N), jnp.float32),
        grid_spec=pltpu.PrefetchScalarGridSpec(
            num_scalar_prefetch=0,
            grid=grid,
            in_specs=[
                pl.BlockSpec((tile, J), lambda i: (i, 0)),   # weights tile
                pl.BlockSpec((3, tile), lambda i: (0, i)),   # xyz^T tile
                pl.BlockSpec((16, J), lambda i: (0, 0)),     # transforms (resident)
            ],
            out_specs=pl.BlockSpec((3, tile), lambda i: (0, i)),
        ),
        compiler_params=pltpu.CompilerParams(
            dimension_semantics=("parallel",),
            vmem_limit_bytes=vmem_limit,
        ),
    )(weights, xyz_t, t16)

    return out if channel_major else out.T


def _reference(xyz, weights, transforms):
    xyzh = jnp.concatenate([xyz, jnp.ones((xyz.shape[0], 1), xyz.dtype)], axis=-1)
    A = jnp.einsum("nj,jrc->nrc", weights, transforms)          # (N, 4, 4)
    out = jnp.einsum("nrc,nc->nr", A, xyzh)                     # (N, 4)
    return out[:, :3]


if __name__ == "__main__":
    key = jax.random.PRNGKey(0)
    N = 3000         # deliberately NOT a multiple of 128 -> exercises the ragged tail
    J = 24           # number of bones (SMPL-like)

    k_xyz, k_w, k_rot, k_t = jax.random.split(key, 4)

    xyz = jax.random.normal(k_xyz, (N, 3), dtype=jnp.float32)

    # Deterministic skinning weights (softmax-normalized).
    w_logits = jax.random.normal(k_w, (N, J), dtype=jnp.float32)
    weights = jax.nn.softmax(w_logits, axis=-1)

    # Deterministic rigid bone transforms: small rotations about z + translation.
    angles = 0.1 * jax.random.normal(k_rot, (J,), dtype=jnp.float32)
    trans = 0.5 * jax.random.normal(k_t, (J, 3), dtype=jnp.float32)
    cos, sin = jnp.cos(angles), jnp.sin(angles)
    zeros, ones = jnp.zeros_like(angles), jnp.ones_like(angles)
    R = jnp.stack(
        [
            jnp.stack([cos, -sin, zeros], axis=-1),
            jnp.stack([sin, cos, zeros], axis=-1),
            jnp.stack([zeros, zeros, ones], axis=-1),
        ],
        axis=-2,
    )                                                            # (J, 3, 3)
    T = jnp.zeros((J, 4, 4), dtype=jnp.float32)
    T = T.at[:, :3, :3].set(R)
    T = T.at[:, :3, 3].set(trans)
    T = T.at[:, 3, 3].set(1.0)

    ref = _reference(xyz, weights, T)

    # 1) f32 weights, default row-major (N,3) API, ragged N (not tile-divisible).
    out = jax.block_until_ready(rigid_deform(xyz, weights, T))
    assert out.shape == (N, 3)
    assert jnp.allclose(out, ref, atol=1e-5, rtol=1e-5), "f32 mismatch vs reference"

    # 2) bf16 weights + channel-major I/O (fast path: half the dominant HBM
    #    stream, no wrapper-side transposes).  Loosened tolerance for bf16.
    out_cm = jax.block_until_ready(
        rigid_deform(xyz.T, weights.astype(jnp.bfloat16), T, channel_major=True)
    )
    assert out_cm.shape == (3, N)
    assert jnp.allclose(out_cm.T, ref, atol=5e-2, rtol=5e-2), "bf16 mismatch vs reference"

    print("KERNEL_OK")
</pallas_src>

<mosaic_0001>
module attributes {stable_mosaic.version = 11 : i64} {
  func.func @_rigid_kernel(%arg0: i32, %arg1: memref<768x24xf32, #tpu.memory_space<vmem>>, %arg2: memref<3x768xf32, #tpu.memory_space<vmem>>, %arg3: memref<16x24xf32, #tpu.memory_space<vmem>>, %arg4: memref<3x768xf32, #tpu.memory_space<vmem>>) attributes {dimension_semantics = [#tpu.dimension_semantics<parallel>], iteration_bounds = array<i64: 4>, scalar_prefetch = 0 : i64, scratch_operands = 0 : i64, tpu.core_type = #tpu.core_type<tc>, window_params = [{transform_indices = @transform_0, window_bounds = array<i64: 768, 24>}, {transform_indices = @transform_1, window_bounds = array<i64: 3, 768>}, {pipeline_mode = #tpu.pipeline_mode<synchronous>, transform_indices = @transform_2, window_bounds = array<i64: 16, 24>}, {transform_indices = @transform_3, window_bounds = array<i64: 3, 768>}]} {
    %c0 = arith.constant 0 : index
    %c0_0 = arith.constant 0 : index
    %0 = vector.load %arg3[%c0, %c0_0] : memref<16x24xf32, #tpu.memory_space<vmem>>, vector<16x24xf32>
    %c0_1 = arith.constant 0 : index
    %c0_2 = arith.constant 0 : index
    %1 = vector.load %arg1[%c0_1, %c0_2] : memref<768x24xf32, #tpu.memory_space<vmem>>, vector<768x24xf32>
    %cst = arith.constant dense<0.000000e+00> : vector<16x768xf32>
    %2 = tpu.matmul %0, %1, %cst {dimension_numbers = #tpu.dot_dimension_numbers<[1], [1], [0], [0], [0, 0, 1, 0], [], []>} : vector<16x24xf32>, vector<768x24xf32>, vector<16x768xf32> -> vector<16x768xf32>
    %c0_3 = arith.constant 0 : index
    %c0_4 = arith.constant 0 : index
    %3 = vector.load %arg2[%c0_3, %c0_4] : memref<3x768xf32, #tpu.memory_space<vmem>>, vector<1x768xf32>
    %4 = vector.shape_cast %3 : vector<1x768xf32> to vector<768xf32>
    %c1 = arith.constant 1 : index
    %c0_5 = arith.constant 0 : index
    %5 = vector.load %arg2[%c1, %c0_5] : memref<3x768xf32, #tpu.memory_space<vmem>>, vector<1x768xf32>
    %6 = vector.shape_cast %5 : vector<1x768xf32> to vector<768xf32>
    %c2 = arith.constant 2 : index
    %c0_6 = arith.constant 0 : index
    %7 = vector.load %arg2[%c2, %c0_6] : memref<3x768xf32, #tpu.memory_space<vmem>>, vector<1x768xf32>
    %8 = vector.shape_cast %7 : vector<1x768xf32> to vector<768xf32>
    %9 = vector.extract_strided_slice %2 {offsets = [0, 0], sizes = [1, 768], strides = [1, 1]} : vector<16x768xf32> to vector<1x768xf32>
    %10 = vector.shape_cast %9 : vector<1x768xf32> to vector<768xf32>
    %11 = arith.mulf %10, %4 : vector<768xf32>
    %12 = vector.extract_strided_slice %2 {offsets = [1, 0], sizes = [1, 768], strides = [1, 1]} : vector<16x768xf32> to vector<1x768xf32>
    %13 = vector.shape_cast %12 : vector<1x768xf32> to vector<768xf32>
    %14 = arith.mulf %13, %6 : vector<768xf32>
    %15 = arith.addf %11, %14 : vector<768xf32>
    %16 = vector.extract_strided_slice %2 {offsets = [2, 0], sizes = [1, 768], strides = [1, 1]} : vector<16x768xf32> to vector<1x768xf32>
    %17 = vector.shape_cast %16 : vector<1x768xf32> to vector<768xf32>
    %18 = arith.mulf %17, %8 : vector<768xf32>
    %19 = arith.addf %15, %18 : vector<768xf32>
    %20 = vector.extract_strided_slice %2 {offsets = [3, 0], sizes = [1, 768], strides = [1, 1]} : vector<16x768xf32> to vector<1x768xf32>
    %21 = vector.shape_cast %20 : vector<1x768xf32> to vector<768xf32>
    %22 = arith.addf %19, %21 : vector<768xf32>
    %c0_7 = arith.constant 0 : index
    %c0_8 = arith.constant 0 : index
    %23 = vector.load %arg4[%c0_7, %c0_8] : memref<3x768xf32, #tpu.memory_space<vmem>>, vector<1x768xf32>
    %24 = vector.shape_cast %23 : vector<1x768xf32> to vector<768xf32>
    %25 = vector.shape_cast %22 : vector<768xf32> to vector<1x768xf32>
    tpu.vector_store %arg4[%c0_7, %c0_8], %25 {strides = array<i32>} : memref<3x768xf32, #tpu.memory_space<vmem>>, vector<1x768xf32>,
    %26 = vector.extract_strided_slice %2 {offsets = [4, 0], sizes = [1, 768], strides = [1, 1]} : vector<16x768xf32> to vector<1x768xf32>
    %27 = vector.shape_cast %26 : vector<1x768xf32> to vector<768xf32>
    %28 = arith.mulf %27, %4 : vector<768xf32>
    %29 = vector.extract_strided_slice %2 {offsets = [5, 0], sizes = [1, 768], strides = [1, 1]} : vector<16x768xf32> to vector<1x768xf32>
    %30 = vector.shape_cast %29 : vector<1x768xf32> to vector<768xf32>
    %31 = arith.mulf %30, %6 : vector<768xf32>
    %32 = arith.addf %28, %31 : vector<768xf32>
    %33 = vector.extract_strided_slice %2 {offsets = [6, 0], sizes = [1, 768], strides = [1, 1]} : vector<16x768xf32> to vector<1x768xf32>
    %34 = vector.shape_cast %33 : vector<1x768xf32> to vector<768xf32>
    %35 = arith.mulf %34, %8 : vector<768xf32>
    %36 = arith.addf %32, %35 : vector<768xf32>
    %37 = vector.extract_strided_slice %2 {offsets = [7, 0], sizes = [1, 768], strides = [1, 1]} : vector<16x768xf32> to vector<1x768xf32>
    %38 = vector.shape_cast %37 : vector<1x768xf32> to vector<768xf32>
    %39 = arith.addf %36, %38 : vector<768xf32>
    %c1_9 = arith.constant 1 : index
    %c0_10 = arith.constant 0 : index
    %40 = vector.load %arg4[%c1_9, %c0_10] : memref<3x768xf32, #tpu.memory_space<vmem>>, vector<1x768xf32>
    %41 = vector.shape_cast %40 : vector<1x768xf32> to vector<768xf32>
    %42 = vector.shape_cast %39 : vector<768xf32> to vector<1x768xf32>
    tpu.vector_store %arg4[%c1_9, %c0_10], %42 {strides = array<i32>} : memref<3x768xf32, #tpu.memory_space<vmem>>, vector<1x768xf32>,
    %43 = vector.extract_strided_slice %2 {offsets = [8, 0], sizes = [1, 768], strides = [1, 1]} : vector<16x768xf32> to vector<1x768xf32>
    %44 = vector.shape_cast %43 : vector<1x768xf32> to vector<768xf32>
    %45 = arith.mulf %44, %4 : vector<768xf32>
    %46 = vector.extract_strided_slice %2 {offsets = [9, 0], sizes = [1, 768], strides = [1, 1]} : vector<16x768xf32> to vector<1x768xf32>
    %47 = vector.shape_cast %46 : vector<1x768xf32> to vector<768xf32>
    %48 = arith.mulf %47, %6 : vector<768xf32>
    %49 = arith.addf %45, %48 : vector<768xf32>
    %50 = vector.extract_strided_slice %2 {offsets = [10, 0], sizes = [1, 768], strides = [1, 1]} : vector<16x768xf32> to vector<1x768xf32>
    %51 = vector.shape_cast %50 : vector<1x768xf32> to vector<768xf32>
    %52 = arith.mulf %51, %8 : vector<768xf32>
    %53 = arith.addf %49, %52 : vector<768xf32>
    %54 = vector.extract_strided_slice %2 {offsets = [11, 0], sizes = [1, 768], strides = [1, 1]} : vector<16x768xf32> to vector<1x768xf32>
    %55 = vector.shape_cast %54 : vector<1x768xf32> to vector<768xf32>
    %56 = arith.addf %53, %55 : vector<768xf32>
    %c2_11 = arith.constant 2 : index
    %c0_12 = arith.constant 0 : index
    %57 = vector.load %arg4[%c2_11, %c0_12] : memref<3x768xf32, #tpu.memory_space<vmem>>, vector<1x768xf32>
    %58 = vector.shape_cast %57 : vector<1x768xf32> to vector<768xf32>
    %59 = vector.shape_cast %56 : vector<768xf32> to vector<1x768xf32>
    tpu.vector_store %arg4[%c2_11, %c0_12], %59 {strides = array<i32>} : memref<3x768xf32, #tpu.memory_space<vmem>>, vector<1x768xf32>,
    return
  }
  func.func @transform_0(%arg0: i32) -> (i32, i32) {
    %c0_i32 = arith.constant 0 : i32
    %c0_i32_0 = arith.constant 0 : i32
    return %arg0, %c0_i32 : i32, i32
  }
  func.func @transform_1(%arg0: i32) -> (i32, i32) {
    %c0_i32 = arith.constant 0 : i32
    %c0_i32_0 = arith.constant 0 : i32
    return %c0_i32, %arg0 : i32, i32
  }
  func.func @transform_2(%arg0: i32) -> (i32, i32) {
    %c0_i32 = arith.constant 0 : i32
    %c0_i32_0 = arith.constant 0 : i32
    %c0_i32_1 = arith.constant 0 : i32
    return %c0_i32, %c0_i32_0 : i32, i32
  }
  func.func @transform_3(%arg0: i32) -> (i32, i32) {
    %c0_i32 = arith.constant 0 : i32
    %c0_i32_0 = arith.constant 0 : i32
    return %c0_i32, %arg0 : i32, i32
  }
}

</mosaic_0001>

<llo_original>
// kernel: rigid_deform.1
$region0: #{rigid_deform.1}
  #allocation0 [shape = 'u32[]', space=smem, size = 0x4, offset = 0x4, fixed_abs, tag = 'smem constant byte address 0x4 - core index']
  #allocation1 [shape = 'u32[144,128]{1,0:T(1,128)}', space=vmem, size = 0x12000, scoped, tag = 'internal scratch']
  %s0 = inlined_call_operand.vmem [shape: f32[3000,24], index: 0, kind: input, shape index: {}]
  %s1 = inlined_call_operand.vmem [shape: f32[3,3000], index: 1, kind: input, shape index: {}]
  %s2 = inlined_call_operand.vmem [shape: f32[16,24], index: 2, kind: input, shape index: {}]
  %s3 = inlined_call_operand.hbm [shape: f32[3,3000], index: 3, kind: output, shape index: {}]
  %s4 = sld [smem:[#allocation0]]
  $region45: #{rigid_deform.1} parent=0
    _
  %s6 = ssub.s32 1, %s4
  %s7 = scalar_select 0, %s6, %s4
  $region1: #{rigid_deform.1} parent=0
    #allocation2 [shape = 'u8[24576]{0}', space=vmem, size = 0x6000, scoped, tag = 'output window, operand 0']
    #allocation3 [shape = 's32[2]{0}', space=sflag, size = 0x8, scoped, tag = 'scoped memory for rigid_deform.1']
    %8 = vsyncpa [#allocation3], 0
    %s9 = scalar_lea.sflag [#allocation3], 1
    %10 = vsyncpa %s9, 0
    loop: start=0, step=1, limit=6
    $region2: #{rigid_deform.1} parent=1 // loop_pre_header
      _
    $region3: #{rigid_deform.1} parent=1 // loop_header
      %s12 = sphi 0, %s16
      %p13 = scmp.ge.s32.totalorder %s12, 6
      %s22 = sphi 0, %s24
      %s25 = sphi 0, %s22
      %s26 = sphi 0, %s25
      %s42 = sphi 0, %s26
      %s48 = sphi 0, %s50
      %s51 = sphi 0, %s48
      %s52 = sphi 0, %s51
      %s68 = sphi 0, %s52
      %s72 = sphi 0, %s72
      %s74 = sphi 0, %s72
      %s75 = sphi 0, %s74
      %s89 = sphi 0, %s75
      %s95 = sphi 0, %s97
      %s98 = sphi 0, %s95
      %s99 = sphi 0, %s98
      %s115 = sphi 0, %s99
    $region4: #{rigid_deform.1} parent=1 // loop_header_branch
      %15 = sbr.rel (%p13) target = $region8
    $region5: #{rigid_deform.1} parent=1 // loop_body
      %s17 = ssub.s32 %s12, 1
      %s18 = ssub.s32 %s12, 2
      %s19 = sadd.s32 %s12, 1
      %s20 = ssub.s32 %s12, %s19
      %p21 = scmp.eq.s32.totalorder %s20, 0
      %s23 = sadd.s32 %s22, 1
      %s24 = scalar_select %p21, %s22, %s23
      %p27 = pneg %p21
      %p28 = scmp.eq.s32.totalorder %s12, 3
      %p29 = por %p27, %p28
      %p30 = scmp.ne.s32.totalorder %s22, %s25
      %p31 = scmp.eq.s32.totalorder %s12, 0
      %p32 = por %p30, %p31
      %p33 = scmp.ne.s32.totalorder %s22, %s25
      %p34 = scmp.eq.s32.totalorder %s17, 3
      %p35 = por %p33, %p34
      %p36 = scmp.ne.s32.totalorder %s25, %s26
      %p37 = scmp.eq.s32.totalorder %s17, 0
      %p38 = por %p36, %p37
      %p39 = scmp.ne.s32.totalorder %s25, %s26
      %p40 = scmp.eq.s32.totalorder %s18, 3
      %p41 = por %p39, %p40
      %p43 = scmp.ne.s32.totalorder %s26, %s42
      %p44 = scmp.eq.s32.totalorder %s18, 0
      %p45 = por %p43, %p44
      %s46 = ssub.s32 %s12, %s19
      %p47 = scmp.eq.s32.totalorder %s46, 0
      %s49 = sadd.s32 %s48, 1
      %s50 = scalar_select %p47, %s48, %s49
      %p53 = pneg %p47
      %p54 = scmp.eq.s32.totalorder %s12, 3
      %p55 = por %p53, %p54
      %p56 = scmp.ne.s32.totalorder %s48, %s51
      %p57 = scmp.eq.s32.totalorder %s12, 0
      %p58 = por %p56, %p57
      %p59 = scmp.ne.s32.totalorder %s48, %s51
      %p60 = scmp.eq.s32.totalorder %s17, 3
      %p61 = por %p59, %p60
      %p62 = scmp.ne.s32.totalorder %s51, %s52
      %p63 = scmp.eq.s32.totalorder %s17, 0
      %p64 = por %p62, %p63
      %p65 = scmp.ne.s32.totalorder %s51, %s52
      %p66 = scmp.eq.s32.totalorder %s18, 3
      %p67 = por %p65, %p66
      %p69 = scmp.ne.s32.totalorder %s52, %s68
      %p70 = scmp.eq.s32.totalorder %s18, 0
      %p71 = por %p69, %p70
      %s73 = sadd.s32 %s72, 1
      %p76 = scmp.eq.s32.totalorder %s12, 3
      %p77 = scmp.ne.s32.totalorder %s72, %s74
      %p78 = scmp.eq.s32.totalorder %s12, 0
      %p79 = por %p77, %p78
      %p80 = scmp.ne.s32.totalorder %s72, %s74
      %p81 = scmp.eq.s32.totalorder %s17, 3
      %p82 = por %p80, %p81
      %p83 = scmp.ne.s32.totalorder %s74, %s75
      %p84 = scmp.eq.s32.totalorder %s17, 0
      %p85 = por %p83, %p84
      %p86 = scmp.ne.s32.totalorder %s74, %s75
      %p87 = scmp.eq.s32.totalorder %s18, 3
      %p88 = por %p86, %p87
      %p90 = scmp.ne.s32.totalorder %s75, %s89
      %p91 = scmp.eq.s32.totalorder %s18, 0
      %p92 = por %p90, %p91
      %s93 = ssub.s32 %s12, %s19
      %p94 = scmp.eq.s32.totalorder %s93, 0
      %s96 = sadd.s32 %s95, 1
      %s97 = scalar_select %p94, %s95, %s96
      %p100 = pneg %p94
      %p101 = scmp.eq.s32.totalorder %s12, 3
      %p102 = por %p100, %p101
      %p103 = scmp.ne.s32.totalorder %s95, %s98
      %p104 = scmp.eq.s32.totalorder %s12, 0
      %p105 = por %p103, %p104
      %p106 = scmp.ne.s32.totalorder %s95, %s98
      %p107 = scmp.eq.s32.totalorder %s17, 3
      %p108 = por %p106, %p107
      %p109 = scmp.ne.s32.totalorder %s98, %s99
      %p110 = scmp.eq.s32.totalorder %s17, 0
      %p111 = por %p109, %p110
      %p112 = scmp.ne.s32.totalorder %s98, %s99
      %p113 = scmp.eq.s32.totalorder %s18, 3
      %p114 = por %p112, %p113
      %p116 = scmp.ne.s32.totalorder %s99, %s115
      %p117 = scmp.eq.s32.totalorder %s18, 0
      %p118 = por %p116, %p117
      %p119 = scmp.le.s32.totalorder 1, %s12
      %p120 = scmp.lt.s32.totalorder %s12, 5
      %p121 = pnand %p119, %p120
      %p122 = pneg %p121
      // Predicated region
      $region9: #{rigid_deform.1} parent=5 // pred_check
        _
      $region10: #{rigid_deform.1} parent=5 // pred_check_branch
        %124 = sbr.rel (%p121) target = $region12
      $region11: #{rigid_deform.1} parent=5 // pred_region
        %s125 = ssub.s32 %s12, 1
        // Predicated region
        $region13: #{rigid_deform.1} parent=11 // pred_check
          %p126 = pneg %p85
        $region14: #{rigid_deform.1} parent=11 // pred_check_branch
          %128 = sbr.rel (%p126) target = $region16
        $region15: #{rigid_deform.1} parent=11 // pred_region
          _
        $region16: #{rigid_deform.1} parent=11 // pred_fallthru
          _
      $region12: #{rigid_deform.1} parent=5 // pred_fallthru
        _
      %p129 = scmp.lt.s32.totalorder %s12, 4
      // Predicated region
      $region17: #{rigid_deform.1} parent=5 // pred_check
        %p130 = pneg %p129
      $region18: #{rigid_deform.1} parent=5 // pred_check_branch
        %132 = sbr.rel (%p130) target = $region20
      $region19: #{rigid_deform.1} parent=5 // pred_region
        // Predicated region
        $region21: #{rigid_deform.1} parent=19 // pred_check
          %p133 = pneg %p32
        $region22: #{rigid_deform.1} parent=19 // pred_check_branch
          %135 = sbr.rel (%p133) target = $region24
        $region23: #{rigid_deform.1} parent=19 // pred_region
          %s136 = smul.u32 96, %s12
          %s137 = ssub.s32 375, %s136
          %p138 = scmp.lt.s32.totalorder %s137, 96
          %s139 = scalar_select %p138, %s137, 96
          %s140 = smul.u32 128, %s139
          %p141 = scmp.lt.s32.totalorder %s136, 374
          %s142 = scalar_select %p141, %s136, 374
          %s143 = smul.addr %s142, 8
          %s144 = scalar_lea.vmem %s0, %s143
          %s145 = smul.u32 96, %s12
          %s146 = ssub.s32 375, %s145
          %p147 = scmp.lt.s32.totalorder %s146, 96
          %s148 = scalar_select %p147, %s146, 96
          %s149 = smul.u32 128, %s148
        $region24: #{rigid_deform.1} parent=19 // pred_fallthru
          _
        // Predicated region
        $region25: #{rigid_deform.1} parent=19 // pred_check
          %p150 = pneg %p58
        $region26: #{rigid_deform.1} parent=19 // pred_check_branch
          %152 = sbr.rel (%p150) target = $region28
        $region27: #{rigid_deform.1} parent=19 // pred_region
          %s153 = smul.u32 6, %s12
          %p154 = scmp.lt.s32.totalorder %s153, 23
          %s155 = scalar_select %p154, %s153, 23
          %s156 = smul.addr %s155, 4
          %s157 = scalar_lea.vmem %s1, %s156
          %s158 = smul.u32 6, %s12
        $region28: #{rigid_deform.1} parent=19 // pred_fallthru
          _
      $region20: #{rigid_deform.1} parent=5 // pred_fallthru
        _
      %p159 = scmp.le.s32.totalorder 1, %s12
      %p160 = scmp.lt.s32.totalorder %s12, 5
      %p161 = pnand %p159, %p160
      %p162 = pneg %p161
      // Predicated region
      $region29: #{rigid_deform.1} parent=5 // pred_check
        _
      $region30: #{rigid_deform.1} parent=5 // pred_check_branch
        %164 = sbr.rel (%p161) target = $region32
      $region31: #{rigid_deform.1} parent=5 // pred_region
        %s165 = ssub.s32 %s12, 1
        %s166 = smul.u32 96, %s17
        %s167 = ssub.s32 375, %s166
        %p168 = scmp.lt.s32.totalorder %s167, 96
        %s169 = scalar_select %p168, %s167, 96
        %s170 = smul.u32 128, %s169
        %p171 = scmp.lt.s32.totalorder %s166, 374
        %s172 = scalar_select %p171, %s166, 374
        %s173 = smul.addr %s172, 8
        %s174 = scalar_lea.vmem %s0, %s173
        %p175 = pneg %p38
        %p176 = pneg %p35
        %s177 = smul.u32 6, %s17
        %p178 = scmp.lt.s32.totalorder %s177, 23
        %s179 = scalar_select %p178, %s177, 23
        %s180 = smul.addr %s179, 4
        %s181 = scalar_lea.vmem %s1, %s180
        %p182 = pneg %p64
        %p183 = pneg %p61
        %p184 = pneg %p85
        %p185 = pneg %p82
        %p186 = pneg %p111
        %p187 = pneg %p108
        %s188 = sand.u32 %s98, 1
        %s189 = scalar_lea.sflag [#allocation3], %s188
        %s190 = sand.u32 %s98, 1
        %s191 = smul.addr %s190, 24
        %s192 = scalar_lea.vmem [#allocation2], %s191
        %s193 = smul.u32 96, %s17
        %s194 = ssub.s32 375, %s193
        %p195 = scmp.lt.s32.totalorder %s194, 96
        %s196 = scalar_select %p195, %s194, 96
        %s197 = smul.u32 128, %s196
        %p198 = scmp.lt.s32.totalorder %s193, 374
        %s199 = scalar_select %p198, %s193, 374
        %s200 = smul.addr %s199, 8
        %s201 = scalar_lea.vmem %s0, %s200
        %s202 = smul.u32 96, %s17
        %s203 = ssub.s32 375, %s202
        %p204 = scmp.lt.s32.totalorder %s203, 96
        %s205 = scalar_select %p204, %s203, 96
        %s206 = smul.u32 128, %s205
        %s207 = smul.u32 6, %s17
        %p208 = scmp.lt.s32.totalorder %s207, 23
        %s209 = scalar_select %p208, %s207, 23
        %s210 = smul.addr %s209, 4
        %s211 = scalar_lea.vmem %s1, %s210
        %s212 = smul.u32 6, %s17
        %s213 = smul.u32 6, %s17
        %v214 = vld [vmem:[%s2] sm:$0xff]
        %v215 = vld [vmem:[%s2 + $0x8] sm:$0xff]
        %v216 = vld [vmem:[%s201] sm:$0xff]
        %v217 = vld [vmem:[%s201 + $0x8] sm:$0xff]
        %v218 = vld [vmem:[%s201 + $0x10] sm:$0xff]
        %v219 = vld [vmem:[%s201 + $0x18] sm:$0xff]
        %v220 = vld [vmem:[%s201 + $0x20] sm:$0xff]
        %v221 = vld [vmem:[%s201 + $0x28] sm:$0xff]
        %v222 = vld [vmem:[%s201 + $0x30] sm:$0xff]
        %v223 = vld [vmem:[%s201 + $0x38] sm:$0xff]
        %v224 = vld [vmem:[%s201 + $0x40] sm:$0xff]
        %v225 = vld [vmem:[%s201 + $0x48] sm:$0xff]
        %v226 = vld [vmem:[%s201 + $0x50] sm:$0xff]
        %v227 = vld [vmem:[%s201 + $0x58] sm:$0xff]
        %v228 = vld [vmem:[%s201 + $0x60] sm:$0xff]
        %v229 = vld [vmem:[%s201 + $0x68] sm:$0xff]
        %v230 = vld [vmem:[%s201 + $0x70] sm:$0xff]
        %v231 = vld [vmem:[%s201 + $0x78] sm:$0xff]
        %v232 = vld [vmem:[%s201 + $0x80] sm:$0xff]
        %v233 = vld [vmem:[%s201 + $0x88] sm:$0xff]
        %v234 = vld [vmem:[%s201 + $0x90] sm:$0xff]
        %v235 = vld [vmem:[%s201 + $0x98] sm:$0xff]
        %v236 = vld [vmem:[%s201 + $0xa0] sm:$0xff]
        %v237 = vld [vmem:[%s201 + $0xa8] sm:$0xff]
        %v238 = vld [vmem:[%s201 + $0xb0] sm:$0xff]
        %v239 = vld [vmem:[%s201 + $0xb8] sm:$0xff]
        %v240 = vld [vmem:[%s201 + $0xc0] sm:$0xff]
        %v241 = vld [vmem:[%s201 + $0xc8] sm:$0xff]
        %v242 = vld [vmem:[%s201 + $0xd0] sm:$0xff]
        %v243 = vld [vmem:[%s201 + $0xd8] sm:$0xff]
        %v244 = vld [vmem:[%s201 + $0xe0] sm:$0xff]
        %v245 = vld [vmem:[%s201 + $0xe8] sm:$0xff]
        %v246 = vld [vmem:[%s201 + $0xf0] sm:$0xff]
        %v247 = vld [vmem:[%s201 + $0xf8] sm:$0xff]
        %v248 = vld [vmem:[%s201 + $0x100] sm:$0xff]
        %v249 = vld [vmem:[%s201 + $0x108] sm:$0xff]
        %v250 = vld [vmem:[%s201 + $0x110] sm:$0xff]
        %v251 = vld [vmem:[%s201 + $0x118] sm:$0xff]
        %v252 = vld [vmem:[%s201 + $0x120] sm:$0xff]
        %v253 = vld [vmem:[%s201 + $0x128] sm:$0xff]
        %v254 = vld [vmem:[%s201 + $0x130] sm:$0xff]
        %v255 = vld [vmem:[%s201 + $0x138] sm:$0xff]
        %v256 = vld [vmem:[%s201 + $0x140] sm:$0xff]
        %v257 = vld [vmem:[%s201 + $0x148] sm:$0xff]
        %v258 = vld [vmem:[%s201 + $0x150] sm:$0xff]
        %v259 = vld [vmem:[%s201 + $0x158] sm:$0xff]
        %v260 = vld [vmem:[%s201 + $0x160] sm:$0xff]
        %v261 = vld [vmem:[%s201 + $0x168] sm:$0xff]
        %v262 = vld [vmem:[%s201 + $0x170] sm:$0xff]
        %v263 = vld [vmem:[%s201 + $0x178] sm:$0xff]
        %v264 = vld [vmem:[%s201 + $0x180] sm:$0xff]
        %v265 = vld [vmem:[%s201 + $0x188] sm:$0xff]
        %v266 = vld [vmem:[%s201 + $0x190] sm:$0xff]
        %v267 = vld [vmem:[%s201 + $0x198] sm:$0xff]
        %v268 = vld [vmem:[%s201 + $0x1a0] sm:$0xff]
        %v269 = vld [vmem:[%s201 + $0x1a8] sm:$0xff]
        %v270 = vld [vmem:[%s201 + $0x1b0] sm:$0xff]
        %v271 = vld [vmem:[%s201 + $0x1b8] sm:$0xff]
        %v272 = vld [vmem:[%s201 + $0x1c0] sm:$0xff]
        %v273 = vld [vmem:[%s201 + $0x1c8] sm:$0xff]
        %v274 = vld [vmem:[%s201 + $0x1d0] sm:$0xff]
        %v275 = vld [vmem:[%s201 + $0x1d8] sm:$0xff]
        %v276 = vld [vmem:[%s201 + $0x1e0] sm:$0xff]
        %v277 = vld [vmem:[%s201 + $0x1e8] sm:$0xff]
        %v278 = vld [vmem:[%s201 + $0x1f0] sm:$0xff]
        %v279 = vld [vmem:[%s201 + $0x1f8] sm:$0xff]
        %v280 = vld [vmem:[%s201 + $0x200] sm:$0xff]
        %v281 = vld [vmem:[%s201 + $0x208] sm:$0xff]
        %v282 = vld [vmem:[%s201 + $0x210] sm:$0xff]
        %v283 = vld [vmem:[%s201 + $0x218] sm:$0xff]
        %v284 = vld [vmem:[%s201 + $0x220] sm:$0xff]
        %v285 = vld [vmem:[%s201 + $0x228] sm:$0xff]
        %v286 = vld [vmem:[%s201 + $0x230] sm:$0xff]
        %v287 = vld [vmem:[%s201 + $0x238] sm:$0xff]
        %v288 = vld [vmem:[%s201 + $0x240] sm:$0xff]
        %v289 = vld [vmem:[%s201 + $0x248] sm:$0xff]
        %v290 = vld [vmem:[%s201 + $0x250] sm:$0xff]
        %v291 = vld [vmem:[%s201 + $0x258] sm:$0xff]
        %v292 = vld [vmem:[%s201 + $0x260] sm:$0xff]
        %v293 = vld [vmem:[%s201 + $0x268] sm:$0xff]
        %v294 = vld [vmem:[%s201 + $0x270] sm:$0xff]
        %v295 = vld [vmem:[%s201 + $0x278] sm:$0xff]
        %v296 = vld [vmem:[%s201 + $0x280] sm:$0xff]
        %v297 = vld [vmem:[%s201 + $0x288] sm:$0xff]
        %v298 = vld [vmem:[%s201 + $0x290] sm:$0xff]
        %v299 = vld [vmem:[%s201 + $0x298] sm:$0xff]
        %v300 = vld [vmem:[%s201 + $0x2a0] sm:$0xff]
        %v301 = vld [vmem:[%s201 + $0x2a8] sm:$0xff]
        %v302 = vld [vmem:[%s201 + $0x2b0] sm:$0xff]
        %v303 = vld [vmem:[%s201 + $0x2b8] sm:$0xff]
        %v304 = vld [vmem:[%s201 + $0x2c0] sm:$0xff]
        %v305 = vld [vmem:[%s201 + $0x2c8] sm:$0xff]
        %v306 = vld [vmem:[%s201 + $0x2d0] sm:$0xff]
        %v307 = vld [vmem:[%s201 + $0x2d8] sm:$0xff]
        %v308 = vld [vmem:[%s201 + $0x2e0] sm:$0xff]
        %v309 = vld [vmem:[%s201 + $0x2e8] sm:$0xff]
        %v310 = vld [vmem:[%s201 + $0x2f0] sm:$0xff]
        %v311 = vld [vmem:[%s201 + $0x2f8] sm:$0xff]
        %vm312 = vcmask 195584
        %v314 = vsel %vm312, %v214, 0
        %v317 = vsel %vm312, %v215, 0
        %v320 = vsel %vm312, %v216, 0
        %v323 = vsel %vm312, %v217, 0
        %v326 = vsel %vm312, %v218, 0
        %v329 = vsel %vm312, %v219, 0
        %v332 = vsel %vm312, %v220, 0
        %v335 = vsel %vm312, %v221, 0
        %v338 = vsel %vm312, %v222, 0
        %v341 = vsel %vm312, %v223, 0
        %v344 = vsel %vm312, %v224, 0
        %v347 = vsel %vm312, %v225, 0
        %v350 = vsel %vm312, %v226, 0
        %v353 = vsel %vm312, %v227, 0
        %v356 = vsel %vm312, %v228, 0
        %v359 = vsel %vm312, %v229, 0
        %v362 = vsel %vm312, %v230, 0
        %v365 = vsel %vm312, %v231, 0
        %v368 = vsel %vm312, %v232, 0
        %v371 = vsel %vm312, %v233, 0
        %v374 = vsel %vm312, %v234, 0
        %v377 = vsel %vm312, %v235, 0
        %v380 = vsel %vm312, %v236, 0
        %v383 = vsel %vm312, %v237, 0
        %v386 = vsel %vm312, %v238, 0
        %v389 = vsel %vm312, %v239, 0
        %v392 = vsel %vm312, %v240, 0
        %v395 = vsel %vm312, %v241, 0
        %v398 = vsel %vm312, %v242, 0
        %v401 = vsel %vm312, %v243, 0
        %v404 = vsel %vm312, %v244, 0
        %v407 = vsel %vm312, %v245, 0
        %v410 = vsel %vm312, %v246, 0
        %v413 = vsel %vm312, %v247, 0
        %v416 = vsel %vm312, %v248, 0
        %v419 = vsel %vm312, %v249, 0
        %v422 = vsel %vm312, %v250, 0
        %v425 = vsel %vm312, %v251, 0
        %v428 = vsel %vm312, %v252, 0
        %v431 = vsel %vm312, %v253, 0
        %v434 = vsel %vm312, %v254, 0
        %v437 = vsel %vm312, %v255, 0
        %v440 = vsel %vm312, %v256, 0
        %v443 = vsel %vm312, %v257, 0
        %v446 = vsel %vm312, %v258, 0
        %v449 = vsel %vm312, %v259, 0
        %v452 = vsel %vm312, %v260, 0
        %v455 = vsel %vm312, %v261, 0
        %v458 = vsel %vm312, %v262, 0
        %v461 = vsel %vm312, %v263, 0
        %v464 = vsel %vm312, %v264, 0
        %v467 = vsel %vm312, %v265, 0
        %v470 = vsel %vm312, %v266, 0
        %v473 = vsel %vm312, %v267, 0
        %v476 = vsel %vm312, %v268, 0
        %v479 = vsel %vm312, %v269, 0
        %v482 = vsel %vm312, %v270, 0
        %v485 = vsel %vm312, %v271, 0
        %v488 = vsel %vm312, %v272, 0
        %v491 = vsel %vm312, %v273, 0
        %v494 = vsel %vm312, %v274, 0
        %v497 = vsel %vm312, %v275, 0
        %v500 = vsel %vm312, %v276, 0
        %v503 = vsel %vm312, %v277, 0
        %v506 = vsel %vm312, %v278, 0
        %v509 = vsel %vm312, %v279, 0
        %v512 = vsel %vm312, %v280, 0
        %v515 = vsel %vm312, %v281, 0
        %v518 = vsel %vm312, %v282, 0
        %v521 = vsel %vm312, %v283, 0
        %v524 = vsel %vm312, %v284, 0
        %v527 = vsel %vm312, %v285, 0
        %v530 = vsel %vm312, %v286, 0
        %v533 = vsel %vm312, %v287, 0
        %v536 = vsel %vm312, %v288, 0
        %v539 = vsel %vm312, %v289, 0
        %v542 = vsel %vm312, %v290, 0
        %v545 = vsel %vm312, %v291, 0
        %v548 = vsel %vm312, %v292, 0
        %v551 = vsel %vm312, %v293, 0
        %v554 = vsel %vm312, %v294, 0
        %v557 = vsel %vm312, %v295, 0
        %v560 = vsel %vm312, %v296, 0
        %v563 = vsel %vm312, %v297, 0
        %v566 = vsel %vm312, %v298, 0
        %v569 = vsel %vm312, %v299, 0
        %v572 = vsel %vm312, %v300, 0
        %v575 = vsel %vm312, %v301, 0
        %v578 = vsel %vm312, %v302, 0
        %v581 = vsel %vm312, %v303, 0
        %v584 = vsel %vm312, %v304, 0
        %v587 = vsel %vm312, %v305, 0
        %v590 = vsel %vm312, %v306, 0
        %v593 = vsel %vm312, %v307, 0
        %v596 = vsel %vm312, %v308, 0
        %v599 = vsel %vm312, %v309, 0
        %v602 = vsel %vm312, %v310, 0
        %v605 = vsel %vm312, %v311, 0
        %607 = vmatprep.subr.mxu0 0.0
        %608 = vmatpush1.xpose.msra.mxu0 %v320
        %609 = vmatprep.subr.mxu0 0.0
        %610 = vmatpush1.xpose.msra.mxu0 %v323
        %611 = vmatprep.subr.mxu0 0.0
        %612 = vmatpush1.xpose.msra.mxu0 %v326
        %613 = vmatprep.subr.mxu0 0.0
        %614 = vmatpush1.xpose.msra.mxu0 %v329
        %615 = vmatprep.subr.mxu0 0.0
        %616 = vmatpush1.xpose.msra.mxu0 %v332
        %617 = vmatprep.subr.mxu0 0.0
        %618 = vmatpush1.xpose.msra.mxu0 %v335
        %619 = vmatprep.subr.mxu0 0.0
        %620 = vmatpush1.xpose.msra.mxu0 %v338
        %621 = vmatprep.subr.mxu0 0.0
        %622 = vmatpush1.xpose.msra.mxu0 %v341
        %623 = vmatprep.subr.mxu0 0.0
        %624 = vmatpush1.xpose.msra.mxu0 %v344
        %625 = vmatprep.subr.mxu0 0.0
        %626 = vmatpush1.xpose.msra.mxu0 %v347
        %627 = vmatprep.subr.mxu0 0.0
        %628 = vmatpush1.xpose.msra.mxu0 %v350
        %629 = vmatprep.subr.mxu0 0.0
        %630 = vmatpush1.xpose.msra.mxu0 %v353
        %631 = vmatprep.subr.mxu0 0.0
        %632 = vmatpush1.xpose.msra.mxu0 %v356
        %633 = vmatprep.subr.mxu0 0.0
        %634 = vmatpush1.xpose.msra.mxu0 %v359
        %635 = vmatprep.subr.mxu0 0.0
        %636 = vmatpush1.xpose.msra.mxu0 %v362
        %637 = vmatprep.subr.mxu0 0.0
        %638 = vmatpush1.xpose.msra.mxu0 %v365
        %639 = vmatprep.subr.mxu0 0.0
        %640 = vmatpush1.xpose.msra.mxu0 %v368
        %641 = vmatprep.subr.mxu0 0.0
        %642 = vmatpush1.xpose.msra.mxu0 %v371
        %643 = vmatprep.subr.mxu0 0.0
        %644 = vmatpush1.xpose.msra.mxu0 %v374
        %645 = vmatprep.subr.mxu0 0.0
        %646 = vmatpush1.xpose.msra.mxu0 %v377
        %647 = vmatprep.subr.mxu0 0.0
        %648 = vmatpush1.xpose.msra.mxu0 %v380
        %649 = vmatprep.subr.mxu0 0.0
        %650 = vmatpush1.xpose.msra.mxu0 %v383
        %651 = vmatprep.subr.mxu0 0.0
        %652 = vmatpush1.xpose.msra.mxu0 %v386
        %653 = vmatprep.subr.mxu0 0.0
        %654 = vmatpush1.xpose.msra.mxu0 %v389
        %655 = vmatprep.subr.mxu0 0.0
        %656 = vmatpush1.xpose.msra.mxu0 %v392
        %657 = vmatprep.subr.mxu0 0.0
        %658 = vmatpush1.xpose.msra.mxu0 %v395
        %659 = vmatprep.subr.mxu0 0.0
        %660 = vmatpush1.xpose.msra.mxu0 %v398
        %661 = vmatprep.subr.mxu0 0.0
        %662 = vmatpush1.xpose.msra.mxu0 %v401
        %663 = vmatprep.subr.mxu0 0.0
        %664 = vmatpush1.xpose.msra.mxu0 %v404
        %665 = vmatprep.subr.mxu0 0.0
        %666 = vmatpush1.xpose.msra.mxu0 %v407
        %667 = vmatprep.subr.mxu0 0.0
        %668 = vmatpush1.xpose.msra.mxu0 %v410
        %669 = vmatprep.subr.mxu0 0.0
        %670 = vmatpush1.xpose.msra.mxu0 %v413
        %671 = vmatprep.mubr.f32.mxu0 0.0
        %672 = vmatmul.mubr.f32.gmra.mrb[0].mxu0 %v314
        %v673 = vpop.f32.mrb[0].mxu0
        %v674 = vadd.f32 0.0, %v673
        %v675 = vpop.f32.mrb[0].mxu0
        %v676 = vadd.f32 0.0, %v675
        %677 = vmatprep.mubr.f32.mxu0 0.0
        %678 = vmatmul.mubr.f32.gmra.mrb[0].mxu0 %v317
        %v679 = vpop.f32.mrb[0].mxu0
        %v680 = vadd.f32 0.0, %v679
        %v681 = vpop.f32.mrb[0].mxu0
        %v682 = vadd.f32 0.0, %v681
        %683 = vdwg.mxu0
        %684 = vmatprep.subr.mxu0 0.0
        %685 = vmatpush1.xpose.msra.mxu0 %v416
        %686 = vmatprep.subr.mxu0 0.0
        %687 = vmatpush1.xpose.msra.mxu0 %v419
        %688 = vmatprep.subr.mxu0 0.0
        %689 = vmatpush1.xpose.msra.mxu0 %v422
        %690 = vmatprep.subr.mxu0 0.0
        %691 = vmatpush1.xpose.msra.mxu0 %v425
        %692 = vmatprep.subr.mxu0 0.0
        %693 = vmatpush1.xpose.msra.mxu0 %v428
        %694 = vmatprep.subr.mxu0 0.0
        %695 = vmatpush1.xpose.msra.mxu0 %v431
        %696 = vmatprep.subr.mxu0 0.0
        %697 = vmatpush1.xpose.msra.mxu0 %v434
        %698 = vmatprep.subr.mxu0 0.0
        %699 = vmatpush1.xpose.msra.mxu0 %v437
        %700 = vmatprep.subr.mxu0 0.0
        %701 = vmatpush1.xpose.msra.mxu0 %v440
        %702 = vmatprep.subr.mxu0 0.0
        %703 = vmatpush1.xpose.msra.mxu0 %v443
        %704 = vmatprep.subr.mxu0 0.0
        %705 = vmatpush1.xpose.msra.mxu0 %v446
        %706 = vmatprep.subr.mxu0 0.0
        %707 = vmatpush1.xpose.msra.mxu0 %v449
        %708 = vmatprep.subr.mxu0 0.0
        %709 = vmatpush1.xpose.msra.mxu0 %v452
        %710 = vmatprep.subr.mxu0 0.0
        %711 = vmatpush1.xpose.msra.mxu0 %v455
        %712 = vmatprep.subr.mxu0 0.0
        %713 = vmatpush1.xpose.msra.mxu0 %v458
        %714 = vmatprep.subr.mxu0 0.0
        %715 = vmatpush1.xpose.msra.mxu0 %v461
        %716 = vmatprep.subr.mxu0 0.0
        %717 = vmatpush1.xpose.msra.mxu0 %v464
        %718 = vmatprep.subr.mxu0 0.0
        %719 = vmatpush1.xpose.msra.mxu0 %v467
        %720 = vmatprep.subr.mxu0 0.0
        %721 = vmatpush1.xpose.msra.mxu0 %v470
        %722 = vmatprep.subr.mxu0 0.0
        %723 = vmatpush1.xpose.msra.mxu0 %v473
        %724 = vmatprep.subr.mxu0 0.0
        %725 = vmatpush1.xpose.msra.mxu0 %v476
        %726 = vmatprep.subr.mxu0 0.0
        %727 = vmatpush1.xpose.msra.mxu0 %v479
        %728 = vmatprep.subr.mxu0 0.0
        %729 = vmatpush1.xpose.msra.mxu0 %v482
        %730 = vmatprep.subr.mxu0 0.0
        %731 = vmatpush1.xpose.msra.mxu0 %v485
        %732 = vmatprep.subr.mxu0 0.0
        %733 = vmatpush1.xpose.msra.mxu0 %v488
        %734 = vmatprep.subr.mxu0 0.0
        %735 = vmatpush1.xpose.msra.mxu0 %v491
        %736 = vmatprep.subr.mxu0 0.0
        %737 = vmatpush1.xpose.msra.mxu0 %v494
        %738 = vmatprep.subr.mxu0 0.0
        %739 = vmatpush1.xpose.msra.mxu0 %v497
        %740 = vmatprep.subr.mxu0 0.0
        %741 = vmatpush1.xpose.msra.mxu0 %v500
        %742 = vmatprep.subr.mxu0 0.0
        %743 = vmatpush1.xpose.msra.mxu0 %v503
        %744 = vmatprep.subr.mxu0 0.0
        %745 = vmatpush1.xpose.msra.mxu0 %v506
        %746 = vmatprep.subr.mxu0 0.0
        %747 = vmatpush1.xpose.msra.mxu0 %v509
        %748 = vmatprep.mubr.f32.mxu0 0.0
        %749 = vmatmul.mubr.f32.gmra.mrb[0].mxu0 %v314
        %v750 = vpop.f32.mrb[0].mxu0
        %v751 = vadd.f32 0.0, %v750
        %v752 = vpop.f32.mrb[0].mxu0
        %v753 = vadd.f32 0.0, %v752
        %754 = vmatprep.mubr.f32.mxu0 0.0
        %755 = vmatmul.mubr.f32.gmra.mrb[0].mxu0 %v317
        %v756 = vpop.f32.mrb[0].mxu0
        %v757 = vadd.f32 0.0, %v756
        %v758 = vpop.f32.mrb[0].mxu0
        %v759 = vadd.f32 0.0, %v758
        %760 = vdwg.mxu0
        %761 = vmatprep.subr.mxu0 0.0
        %762 = vmatpush1.xpose.msra.mxu0 %v512
        %763 = vmatprep.subr.mxu0 0.0
        %764 = vmatpush1.xpose.msra.mxu0 %v515
        %765 = vmatprep.subr.mxu0 0.0
        %766 = vmatpush1.xpose.msra.mxu0 %v518
        %767 = vmatprep.subr.mxu0 0.0
        %768 = vmatpush1.xpose.msra.mxu0 %v521
        %769 = vmatprep.subr.mxu0 0.0
        %770 = vmatpush1.xpose.msra.mxu0 %v524
        %771 = vmatprep.subr.mxu0 0.0
        %772 = vmatpush1.xpose.msra.mxu0 %v527
        %773 = vmatprep.subr.mxu0 0.0
        %774 = vmatpush1.xpose.msra.mxu0 %v530
        %775 = vmatprep.subr.mxu0 0.0
        %776 = vmatpush1.xpose.msra.mxu0 %v533
        %777 = vmatprep.subr.mxu0 0.0
        %778 = vmatpush1.xpose.msra.mxu0 %v536
        %779 = vmatprep.subr.mxu0 0.0
        %780 = vmatpush1.xpose.msra.mxu0 %v539
        %781 = vmatprep.subr.mxu0 0.0
        %782 = vmatpush1.xpose.msra.mxu0 %v542
        %783 = vmatprep.subr.mxu0 0.0
        %784 = vmatpush1.xpose.msra.mxu0 %v545
        %785 = vmatprep.subr.mxu0 0.0
        %786 = vmatpush1.xpose.msra.mxu0 %v548
        %787 = vmatprep.subr.mxu0 0.0
        %788 = vmatpush1.xpose.msra.mxu0 %v551
        %789 = vmatprep.subr.mxu0 0.0
        %790 = vmatpush1.xpose.msra.mxu0 %v554
        %791 = vmatprep.subr.mxu0 0.0
        %792 = vmatpush1.xpose.msra.mxu0 %v557
        %793 = vmatprep.subr.mxu0 0.0
        %794 = vmatpush1.xpose.msra.mxu0 %v560
        %795 = vmatprep.subr.mxu0 0.0
        %796 = vmatpush1.xpose.msra.mxu0 %v563
        %797 = vmatprep.subr.mxu0 0.0
        %798 = vmatpush1.xpose.msra.mxu0 %v566
        %799 = vmatprep.subr.mxu0 0.0
        %800 = vmatpush1.xpose.msra.mxu0 %v569
        %801 = vmatprep.subr.mxu0 0.0
        %802 = vmatpush1.xpose.msra.mxu0 %v572
        %803 = vmatprep.subr.mxu0 0.0
        %804 = vmatpush1.xpose.msra.mxu0 %v575
        %805 = vmatprep.subr.mxu0 0.0
        %806 = vmatpush1.xpose.msra.mxu0 %v578
        %807 = vmatprep.subr.mxu0 0.0
        %808 = vmatpush1.xpose.msra.mxu0 %v581
        %809 = vmatprep.subr.mxu0 0.0
        %810 = vmatpush1.xpose.msra.mxu0 %v584
        %811 = vmatprep.subr.mxu0 0.0
        %812 = vmatpush1.xpose.msra.mxu0 %v587
        %813 = vmatprep.subr.mxu0 0.0
        %814 = vmatpush1.xpose.msra.mxu0 %v590
        %815 = vmatprep.subr.mxu0 0.0
        %816 = vmatpush1.xpose.msra.mxu0 %v593
        %817 = vmatprep.subr.mxu0 0.0
        %818 = vmatpush1.xpose.msra.mxu0 %v596
        %819 = vmatprep.subr.mxu0 0.0
        %820 = vmatpush1.xpose.msra.mxu0 %v599
        %821 = vmatprep.subr.mxu0 0.0
        %822 = vmatpush1.xpose.msra.mxu0 %v602
        %823 = vmatprep.subr.mxu0 0.0
        %824 = vmatpush1.xpose.msra.mxu0 %v605
        %825 = vmatprep.mubr.f32.mxu0 0.0
        %826 = vmatmul.mubr.f32.gmra.mrb[0].mxu0 %v314
        %v827 = vpop.f32.mrb[0].mxu0
        %v828 = vadd.f32 0.0, %v827
        %v829 = vpop.f32.mrb[0].mxu0
        %v830 = vadd.f32 0.0, %v829
        %831 = vmatprep.mubr.f32.mxu0 0.0
        %832 = vmatmul.mubr.f32.gmra.mrb[0].mxu0 %v317
        %v833 = vpop.f32.mrb[0].mxu0
        %v834 = vadd.f32 0.0, %v833
        %v835 = vpop.f32.mrb[0].mxu0
        %v836 = vadd.f32 0.0, %v835
        %837 = vdwg.mxu0
        %v838 = vld [vmem:[%s211] ss:$4 sm:$0x3f]
        %s839 = scalar_lea.vmem %s211, 1
        %v840 = vld [vmem:[%s839] ss:$4 sm:$0x3f]
        %s841 = scalar_lea.vmem %s211, 2
        %v842 = vld [vmem:[%s841] ss:$4 sm:$0x3f]
        %v844 = vlaneseq
        %v845 = vshrl.u32 %v844, 7
        %v846 = vsub.s32 0, %v845
        %v847 = vrot.slane %v838, %v846
        %v848 = vlaneseq
        %v849 = vshrl.u32 %v848, 7
        %v850 = vsub.s32 1, %v849
        %v851 = vrot.slane %v838, %v850
        %v852 = vlaneseq
        %v853 = vshrl.u32 %v852, 7
        %v854 = vsub.s32 2, %v853
        %v855 = vrot.slane %v838, %v854
        %v856 = vlaneseq
        %v857 = vshrl.u32 %v856, 7
        %v858 = vsub.s32 3, %v857
        %v859 = vrot.slane %v838, %v858
        %v860 = vlaneseq
        %v861 = vshrl.u32 %v860, 7
        %v862 = vsub.s32 4, %v861
        %v863 = vrot.slane %v838, %v862
        %v864 = vlaneseq
        %v865 = vshrl.u32 %v864, 7
        %v866 = vsub.s32 5, %v865
        %v867 = vrot.slane %v838, %v866
        %v874 = vmul.f32 %v674, %v847
        %v875 = vmul.f32 %v676, %v851
        %v876 = vmul.f32 %v751, %v855
        %v877 = vmul.f32 %v753, %v859
        %v878 = vmul.f32 %v828, %v863
        %v879 = vmul.f32 %v830, %v867
        %v881 = vlaneseq
        %v882 = vshrl.u32 %v881, 7
        %v883 = vsub.s32 0, %v882
        %v884 = vrot.slane %v840, %v883
        %v885 = vlaneseq
        %v886 = vshrl.u32 %v885, 7
        %v887 = vsub.s32 1, %v886
        %v888 = vrot.slane %v840, %v887
        %v889 = vlaneseq
        %v890 = vshrl.u32 %v889, 7
        %v891 = vsub.s32 2, %v890
        %v892 = vrot.slane %v840, %v891
        %v893 = vlaneseq
        %v894 = vshrl.u32 %v893, 7
        %v895 = vsub.s32 3, %v894
        %v896 = vrot.slane %v840, %v895
        %v897 = vlaneseq
        %v898 = vshrl.u32 %v897, 7
        %v899 = vsub.s32 4, %v898
        %v900 = vrot.slane %v840, %v899
        %v901 = vlaneseq
        %v902 = vshrl.u32 %v901, 7
        %v903 = vsub.s32 5, %v902
        %v904 = vrot.slane %v840, %v903
        %v911 = vmul.f32 %v674, %v884
        %v912 = vmul.f32 %v676, %v888
        %v913 = vmul.f32 %v751, %v892
        %v914 = vmul.f32 %v753, %v896
        %v915 = vmul.f32 %v828, %v900
        %v916 = vmul.f32 %v830, %v904
        %v923 = vrot.slane %v911, 1
        %v924 = vrot.slane %v912, 1
        %v925 = vrot.slane %v913, 1
        %v926 = vrot.slane %v914, 1
        %v927 = vrot.slane %v915, 1
        %v928 = vrot.slane %v916, 1
        %v935 = vadd.f32 %v874, %v923
        %v936 = vadd.f32 %v875, %v924
        %v937 = vadd.f32 %v876, %v925
        %v938 = vadd.f32 %v877, %v926
        %v939 = vadd.f32 %v878, %v927
        %v940 = vadd.f32 %v879, %v928
        %v942 = vlaneseq
        %v943 = vshrl.u32 %v942, 7
        %v944 = vsub.s32 0, %v943
        %v945 = vrot.slane %v842, %v944
        %v946 = vlaneseq
        %v947 = vshrl.u32 %v946, 7
        %v948 = vsub.s32 1, %v947
        %v949 = vrot.slane %v842, %v948
        %v950 = vlaneseq
        %v951 = vshrl.u32 %v950, 7
        %v952 = vsub.s32 2, %v951
        %v953 = vrot.slane %v842, %v952
        %v954 = vlaneseq
        %v955 = vshrl.u32 %v954, 7
        %v956 = vsub.s32 3, %v955
        %v957 = vrot.slane %v842, %v956
        %v958 = vlaneseq
        %v959 = vshrl.u32 %v958, 7
        %v960 = vsub.s32 4, %v959
        %v961 = vrot.slane %v842, %v960
        %v962 = vlaneseq
        %v963 = vshrl.u32 %v962, 7
        %v964 = vsub.s32 5, %v963
        %v965 = vrot.slane %v842, %v964
        %v972 = vmul.f32 %v674, %v945
        %v973 = vmul.f32 %v676, %v949
        %v974 = vmul.f32 %v751, %v953
        %v975 = vmul.f32 %v753, %v957
        %v976 = vmul.f32 %v828, %v961
        %v977 = vmul.f32 %v830, %v965
        %v984 = vrot.slane %v972, 2
        %v985 = vrot.slane %v973, 2
        %v986 = vrot.slane %v974, 2
        %v987 = vrot.slane %v975, 2
        %v988 = vrot.slane %v976, 2
        %v989 = vrot.slane %v977, 2
        %v996 = vadd.f32 %v935, %v984
        %v997 = vadd.f32 %v936, %v985
        %v998 = vadd.f32 %v937, %v986
        %v999 = vadd.f32 %v938, %v987
        %v1000 = vadd.f32 %v939, %v988
        %v1001 = vadd.f32 %v940, %v989
        %v1008 = vrot.slane %v674, 3
        %v1009 = vrot.slane %v676, 3
        %v1010 = vrot.slane %v751, 3
        %v1011 = vrot.slane %v753, 3
        %v1012 = vrot.slane %v828, 3
        %v1013 = vrot.slane %v830, 3
        %v1020 = vadd.f32 %v996, %v1008
        %v1021 = vadd.f32 %v997, %v1009
        %v1022 = vadd.f32 %v998, %v1010
        %v1023 = vadd.f32 %v999, %v1011
        %v1024 = vadd.f32 %v1000, %v1012
        %v1025 = vadd.f32 %v1001, %v1013
        %v1032 = vcombine.low %v1020, %v1021
        %v1033 = vcombine.low %v1022, %v1023
        %v1034 = vcombine.low %v1024, %v1025
        %v1036 = vunpack.c.l.s4 1966171168
        %v1037 = vunpack.c.0.s8 %v1036
        %v1038 = vlaneseq
        %v1039 = vshrl.u32 %v1038, 7
        %v1040 = vsub.s32 %v1037, %v1039
        %v1041 = vrot.slane %v1032, %v1040
        %v1043 = vunpack.c.l.s4 1966171168
        %v1044 = vunpack.c.0.s8 %v1043
        %v1045 = vlaneseq
        %v1046 = vshrl.u32 %v1045, 7
        %v1047 = vsub.s32 %v1044, %v1046
        %v1048 = vrot.slane %v1033, %v1047
        %v1050 = vunpack.c.l.s4 1966171168
        %v1051 = vunpack.c.0.s8 %v1050
        %v1052 = vlaneseq
        %v1053 = vshrl.u32 %v1052, 7
        %v1054 = vsub.s32 %v1051, %v1053
        %v1055 = vrot.slane %v1034, %v1054
        %v1056 = vcombine.low %v1041, %v1048
        %v1058 = vunpack.c.l.s4 1966171168
        %v1059 = vunpack.c.0.s8 %v1058
        %v1060 = vlaneseq
        %v1061 = vshrl.u32 %v1060, 7
        %v1062 = vsub.s32 %v1059, %v1061
        %v1063 = vrot.slane %v1056, %v1062
        %v1065 = vunpack.c.l.s4 1966171168
        %v1066 = vunpack.c.0.s8 %v1065
        %v1067 = vlaneseq
        %v1068 = vshrl.u32 %v1067, 7
        %v1069 = vsub.s32 %v1066, %v1068
        %v1070 = vrot.slane %v1055, %v1069
        %v1071 = vcombine.low %v1063, %v1070
        %v1073 = vlaneseq
        %vm1074 = vcmp.ge.s32.totalorder %v1073, 0
        %vm1075 = vcmp.lt.s32.totalorder %v1073, 768
        %vm1076 = vmand %vm1074, %vm1075
        %1077 = vst.msk [vmem:[%s192] ss:$4 sm:$0x3f] %vm1076, %v1071
        %v1078 = vcombine.high %v1020, %v1021
        %v1079 = vcombine.high %v1022, %v1023
        %v1080 = vcombine.high %v1024, %v1025
        %v1082 = vunpack.c.l.s4 1966171168
        %v1083 = vunpack.c.0.s8 %v1082
        %v1084 = vlaneseq
        %v1085 = vshrl.u32 %v1084, 7
        %v1086 = vsub.s32 %v1083, %v1085
        %v1087 = vrot.slane %v1078, %v1086
        %v1089 = vunpack.c.l.s4 1966171168
        %v1090 = vunpack.c.0.s8 %v1089
        %v1091 = vlaneseq
        %v1092 = vshrl.u32 %v1091, 7
        %v1093 = vsub.s32 %v1090, %v1092
        %v1094 = vrot.slane %v1079, %v1093
        %v1096 = vunpack.c.l.s4 1966171168
        %v1097 = vunpack.c.0.s8 %v1096
        %v1098 = vlaneseq
        %v1099 = vshrl.u32 %v1098, 7
        %v1100 = vsub.s32 %v1097, %v1099
        %v1101 = vrot.slane %v1080, %v1100
        %v1102 = vcombine.low %v1087, %v1094
        %v1104 = vunpack.c.l.s4 1966171168
        %v1105 = vunpack.c.0.s8 %v1104
        %v1106 = vlaneseq
        %v1107 = vshrl.u32 %v1106, 7
        %v1108 = vsub.s32 %v1105, %v1107
        %v1109 = vrot.slane %v1102, %v1108
        %v1111 = vunpack.c.l.s4 1966171168
        %v1112 = vunpack.c.0.s8 %v1111
        %v1113 = vlaneseq
        %v1114 = vshrl.u32 %v1113, 7
        %v1115 = vsub.s32 %v1112, %v1114
        %v1116 = vrot.slane %v1101, %v1115
        %v1117 = vcombine.low %v1109, %v1116
        %s1119 = scalar_lea.vmem %s192, 1 [#allocation2]
        %1120 = vst.msk [vmem:[%s1119] ss:$4 sm:$0x3f] %vm1076, %v1117
        %v1121 = vmul.f32 %v680, %v847
        %v1122 = vmul.f32 %v682, %v851
        %v1123 = vmul.f32 %v757, %v855
        %v1124 = vmul.f32 %v759, %v859
        %v1125 = vmul.f32 %v834, %v863
        %v1126 = vmul.f32 %v836, %v867
        %v1127 = vmul.f32 %v680, %v884
        %v1128 = vmul.f32 %v682, %v888
        %v1129 = vmul.f32 %v757, %v892
        %v1130 = vmul.f32 %v759, %v896
        %v1131 = vmul.f32 %v834, %v900
        %v1132 = vmul.f32 %v836, %v904
        %v1139 = vrot.slane %v1127, 1
        %v1140 = vrot.slane %v1128, 1
        %v1141 = vrot.slane %v1129, 1
        %v1142 = vrot.slane %v1130, 1
        %v1143 = vrot.slane %v1131, 1
        %v1144 = vrot.slane %v1132, 1
        %v1151 = vadd.f32 %v1121, %v1139
        %v1152 = vadd.f32 %v1122, %v1140
        %v1153 = vadd.f32 %v1123, %v1141
        %v1154 = vadd.f32 %v1124, %v1142
        %v1155 = vadd.f32 %v1125, %v1143
        %v1156 = vadd.f32 %v1126, %v1144
        %v1157 = vmul.f32 %v680, %v945
        %v1158 = vmul.f32 %v682, %v949
        %v1159 = vmul.f32 %v757, %v953
        %v1160 = vmul.f32 %v759, %v957
        %v1161 = vmul.f32 %v834, %v961
        %v1162 = vmul.f32 %v836, %v965
        %v1169 = vrot.slane %v1157, 2
        %v1170 = vrot.slane %v1158, 2
        %v1171 = vrot.slane %v1159, 2
        %v1172 = vrot.slane %v1160, 2
        %v1173 = vrot.slane %v1161, 2
        %v1174 = vrot.slane %v1162, 2
        %v1181 = vadd.f32 %v1151, %v1169
        %v1182 = vadd.f32 %v1152, %v1170
        %v1183 = vadd.f32 %v1153, %v1171
        %v1184 = vadd.f32 %v1154, %v1172
        %v1185 = vadd.f32 %v1155, %v1173
        %v1186 = vadd.f32 %v1156, %v1174
        %v1193 = vrot.slane %v680, 3
        %v1194 = vrot.slane %v682, 3
        %v1195 = vrot.slane %v757, 3
        %v1196 = vrot.slane %v759, 3
        %v1197 = vrot.slane %v834, 3
        %v1198 = vrot.slane %v836, 3
        %v1205 = vadd.f32 %v1181, %v1193
        %v1206 = vadd.f32 %v1182, %v1194
        %v1207 = vadd.f32 %v1183, %v1195
        %v1208 = vadd.f32 %v1184, %v1196
        %v1209 = vadd.f32 %v1185, %v1197
        %v1210 = vadd.f32 %v1186, %v1198
        %v1217 = vcombine.low %v1205, %v1206
        %v1218 = vcombine.low %v1207, %v1208
        %v1219 = vcombine.low %v1209, %v1210
        %v1221 = vunpack.c.l.s4 1966171168
        %v1222 = vunpack.c.0.s8 %v1221
        %v1223 = vlaneseq
        %v1224 = vshrl.u32 %v1223, 7
        %v1225 = vsub.s32 %v1222, %v1224
        %v1226 = vrot.slane %v1217, %v1225
        %v1228 = vunpack.c.l.s4 1966171168
        %v1229 = vunpack.c.0.s8 %v1228
        %v1230 = vlaneseq
        %v1231 = vshrl.u32 %v1230, 7
        %v1232 = vsub.s32 %v1229, %v1231
        %v1233 = vrot.slane %v1218, %v1232
        %v1235 = vunpack.c.l.s4 1966171168
        %v1236 = vunpack.c.0.s8 %v1235
        %v1237 = vlaneseq
        %v1238 = vshrl.u32 %v1237, 7
        %v1239 = vsub.s32 %v1236, %v1238
        %v1240 = vrot.slane %v1219, %v1239
        %v1241 = vcombine.low %v1226, %v1233
        %v1243 = vunpack.c.l.s4 1966171168
        %v1244 = vunpack.c.0.s8 %v1243
        %v1245 = vlaneseq
        %v1246 = vshrl.u32 %v1245, 7
        %v1247 = vsub.s32 %v1244, %v1246
        %v1248 = vrot.slane %v1241, %v1247
        %v1250 = vunpack.c.l.s4 1966171168
        %v1251 = vunpack.c.0.s8 %v1250
        %v1252 = vlaneseq
        %v1253 = vshrl.u32 %v1252, 7
        %v1254 = vsub.s32 %v1251, %v1253
        %v1255 = vrot.slane %v1240, %v1254
        %v1256 = vcombine.low %v1248, %v1255
        %s1258 = scalar_lea.vmem %s192, 2 [#allocation2]
        %1259 = vst.msk [vmem:[%s1258] ss:$4 sm:$0x3f] %vm1076, %v1256
        %s1260 = sand.u32 %s98, 1
        %s1261 = scalar_lea.sflag [#allocation3], %s1260
        %s1262 = sand.u32 %s98, 1
        %s1263 = smul.addr %s1262, 24
        %s1264 = scalar_lea.vmem [#allocation2], %s1263
        // Predicated region
        $region33: #{rigid_deform.1} parent=31 // pred_check
          %p1265 = pneg %p108
        $region34: #{rigid_deform.1} parent=31 // pred_check_branch
          %1267 = sbr.rel (%p1265) target = $region36
        $region35: #{rigid_deform.1} parent=31 // pred_region
          %s1268 = smul.u32 6, %s17
          %s1270 = ssub.s32 384, 384
          %1271 = vsyncadd %s1261, %s1270
          %s1272 = smul.addr %s1268, 64
          %s1273 = scalar_lea.hbm %s3, %s1272
          %s1275 = sshll.u32 %s1264, 4
          %s1276 = int_to_ptr.vmem [resolvable:$true] %s1275
          %1278 = dma.vmem_to_hbm [thread:$0]  %s1276, 384, %s1273, %s1261
        $region36: #{rigid_deform.1} parent=31 // pred_fallthru
          _
      $region32: #{rigid_deform.1} parent=5 // pred_fallthru
        _
      %p1279 = scmp.le.s32.totalorder 2, %s12
      // Predicated region
      $region37: #{rigid_deform.1} parent=5 // pred_check
        %p1280 = pneg %p1279
      $region38: #{rigid_deform.1} parent=5 // pred_check_branch
        %1282 = sbr.rel (%p1280) target = $region40
      $region39: #{rigid_deform.1} parent=5 // pred_region
        %s1283 = ssub.s32 %s12, 2
        // Predicated region
        $region41: #{rigid_deform.1} parent=39 // pred_check
          %p1284 = pneg %p114
        $region42: #{rigid_deform.1} parent=39 // pred_check_branch
          %1286 = sbr.rel (%p1284) target = $region44
        $region43: #{rigid_deform.1} parent=39 // pred_region
          %s1287 = sand.u32 %s99, 1
          %s1288 = scalar_lea.sflag [#allocation3], %s1287
          %s1289 = sand.u32 %s99, 1
          %s1290 = smul.addr %s1289, 24
          %s1291 = scalar_lea.vmem [#allocation2], %s1290
          %1292 = dma.done %s1288, 384
        $region44: #{rigid_deform.1} parent=39 // pred_fallthru
          _
      $region40: #{rigid_deform.1} parent=5 // pred_fallthru
        _
    $region6: #{rigid_deform.1} parent=1 // loop_footer
      %s16 = sadd.s32 1, %s12
    $region7: #{rigid_deform.1} parent=1 // loop_footer_branch
      %11 = sbr.rel target = $region3
    $region8: #{rigid_deform.1} parent=1 // loop_exit
      _
    %1293 = vsyncpa [#allocation3], 1
    %s1294 = scalar_lea.sflag [#allocation3], 1
    %1295 = vsyncpa %s1294, 1

</llo_original>
